<compile_context>
chip_gen: v5e
topology: v5e:2x2
jax: 0.10.0
libtpu: 0.0.40
codegen_flags: <defaults>
</compile_context>

<pallas_src>
import math
import functools

import jax
import jax.numpy as jnp
from jax import lax
from jax.experimental import pallas as pl
from jax.experimental.pallas import tpu as pltpu


# ---------------------------------------------------------------------------
# Kernel 1: K / V linear projections, computed exactly once, head-split.
# ---------------------------------------------------------------------------
def _kv_proj_kernel(k_ref, v_ref, wk_ref, wv_ref, kp_ref, vp_ref, *, h, d_k):
    f32 = jnp.float32
    bf16 = jnp.bfloat16
    kb = k_ref[...].astype(bf16)                                  # (ts, D)
    vb = v_ref[...].astype(bf16)                                  # (ts, D)
    kp = jnp.dot(kb, wk_ref[...], preferred_element_type=f32)     # (ts, D) f32
    vp = jnp.dot(vb, wv_ref[...], preferred_element_type=f32)     # (ts, D) f32
    # Static head split (static lane slices): (ts, D) -> h x (ts, d_k).
    for head in range(h):
        lo = head * d_k
        kp_ref[head] = kp[:, lo:lo + d_k].astype(kp_ref.dtype)
        vp_ref[head] = vp[:, lo:lo + d_k].astype(vp_ref.dtype)


# ---------------------------------------------------------------------------
# Kernel 2: fused Q projection + per-head attention + output projection.
# ---------------------------------------------------------------------------
def _attn_kernel(q_ref, kp_ref, vp_ref, mask_ref, wq_ref, wo_ref,
                 out_ref, qh_ref, *, h, d_k):
    f32 = jnp.float32
    bf16 = jnp.bfloat16
    tq, D = q_ref.shape

    # Q projection once per query tile (no redundancy; 1/sqrt(d_k) already
    # folded into wq in the wrapper).  Split heads with STATIC lane slices
    # into a VMEM scratch so the head loop below only indexes leading dims.
    qp = jnp.dot(q_ref[...].astype(bf16), wq_ref[...],
                 preferred_element_type=f32)                      # (tq, D) f32
    for head in range(h):
        lo = head * d_k
        qh_ref[head] = qp[:, lo:lo + d_k].astype(bf16)

    keep = mask_ref[...] != 0                                     # (tq, S) bool

    def head_body(head, acc):
        qh = qh_ref[head]                                         # (tq, d_k) bf16
        kh = kp_ref[head]                                         # (S,  d_k) bf16
        vh = vp_ref[head]                                         # (S,  d_k) bf16

        # (tq, S) scores, contracting the last dims (no transposes/relayout).
        s = lax.dot_general(qh, kh, (((1,), (1,)), ((), ())),
                            preferred_element_type=f32)
        s = jnp.where(keep, s, jnp.float32(-1e9))

        # Softmax with f32 statistics and DEFERRED normalization.
        m = jnp.max(s, axis=-1, keepdims=True)
        p = jnp.exp(s - m)                                        # unnormalized, <= 1
        l = jnp.sum(p, axis=-1, keepdims=True)
        # TODO(synk): attention-probability dropout not applied (eval mode).

        ho = jnp.dot(p.astype(bf16), vh, preferred_element_type=f32)  # (tq, d_k)
        ho = ho * pl.reciprocal(l, approx=True)   # normalize (tq,d_k), not (tq,S)

        # Output projection folded into the head loop:
        #   concat_h(ho_h) @ Wo.T == sum_h ho_h @ Wo.T[h*d_k:(h+1)*d_k, :]
        # -> full-width lane-dense (tq, D) accumulation per head.
        return acc + jnp.dot(ho.astype(bf16), wo_ref[head],
                             preferred_element_type=f32)

    acc = lax.fori_loop(0, h, head_body, jnp.zeros((tq, D), f32))
    out_ref[...] = acc.astype(out_ref.dtype)


# ---------------------------------------------------------------------------
# Wrapper
# ---------------------------------------------------------------------------
def _vmem_limit(*parts):
    total = sum(int(p) for p in parts) + (2 << 20)   # 2 MiB slack
    return int(min(max(total, 16 << 20), 100 << 20))


def multi_head_attention(q, k, v, mask, wq, wk, wv, wo, *, h,
                         q_tile=None, kv_tile=None):
    B, S, D = q.shape
    assert D % h == 0, "d_model is not divisible by h"
    d_k = D // h

    # Query tile: 256 fills the 256-wide MXU on v6e/v7x and halves the number
    # of grid steps vs 128.  KV-projection tile can be larger (tiny residency).
    tq = q_tile if q_tile is not None else min(S, 256)
    assert S % tq == 0, "seq_len must be divisible by the query tile"
    ts = kv_tile if kv_tile is not None else min(S, 512)
    if S % ts != 0:
        ts = tq

    bf16 = jnp.bfloat16
    # Weights are small: transpose to (in, out) once, cast to bf16, fold the
    # 1/sqrt(d_k) scale into the Q weight, and reshape Wo.T to (h, d_k, D) so
    # the output projection accumulates per head.  Activations are NOT cast
    # here (avoids an extra HBM pass) -- the kernels cast blocks on the fly.
    wq_t = (wq.T * (1.0 / math.sqrt(d_k))).astype(bf16)           # (D, D)
    wk_t = wk.T.astype(bf16)                                      # (D, D)
    wv_t = wv.T.astype(bf16)                                      # (D, D)
    wo_h = wo.T.reshape(h, d_k, D).astype(bf16)                   # (h, d_k, D)

    q_itm = q.dtype.itemsize
    m_itm = mask.dtype.itemsize

    # ---- 1) K / V projection: each (S,D)x(D,D) GEMM exactly once ----------
    kv_vmem = _vmem_limit(
        2 * 2 * ts * D * k.dtype.itemsize,   # k, v input blocks (dbl-buffered)
        2 * 2 * D * D * 2,                   # wk, wv
        2 * 2 * ts * D * 2,                  # kp, vp output blocks (bf16)
        4 * ts * D * 4,                      # f32 intermediates
    )
    kv_cost = pl.CostEstimate(
        flops=int(4 * B * S * D * D),
        transcendentals=0,
        bytes_accessed=int(2 * B * S * D * k.dtype.itemsize
                           + 2 * D * D * 2 + 2 * B * S * D * 2))
    kp, vp = pl.pallas_call(
        functools.partial(_kv_proj_kernel, h=h, d_k=d_k),
        out_shape=(jax.ShapeDtypeStruct((B, h, S, d_k), bf16),
                   jax.ShapeDtypeStruct((B, h, S, d_k), bf16)),
        grid_spec=pltpu.PrefetchScalarGridSpec(
            num_scalar_prefetch=0,
            grid=(B, S // ts),
            in_specs=[
                pl.BlockSpec((None, ts, D), lambda b, j: (b, j, 0)),   # k
                pl.BlockSpec((None, ts, D), lambda b, j: (b, j, 0)),   # v
                pl.BlockSpec((D, D), lambda b, j: (0, 0)),             # wk
                pl.BlockSpec((D, D), lambda b, j: (0, 0)),             # wv
            ],
            out_specs=[
                pl.BlockSpec((None, h, ts, d_k), lambda b, j: (b, 0, j, 0)),
                pl.BlockSpec((None, h, ts, d_k), lambda b, j: (b, 0, j, 0)),
            ]),
        compiler_params=pltpu.CompilerParams(
            dimension_semantics=("parallel", "parallel"),
            vmem_limit_bytes=kv_vmem),
        cost_estimate=kv_cost,
    )(k, v, wk_t, wv_t)

    # ---- 2) Attention (+ fused Q and output projections) ------------------
    vmem = _vmem_limit(
        2 * tq * D * q_itm,                  # q blocks
        2 * 2 * S * D * 2,                   # Kp + Vp blocks (bf16, const idx)
        2 * tq * S * m_itm,                  # mask blocks
        2 * 2 * D * D * 2,                   # wq + wo weights
        2 * tq * D * q_itm,                  # out blocks
        tq * D * 2,                          # qh scratch
        3 * tq * S * 4,                      # live scores / probs (f32)
        3 * tq * D * 4,                      # qp / acc / temporaries (f32)
    )
    cost = pl.CostEstimate(
        flops=int(B * (4 * S * D * D + 4 * S * S * D)),
        transcendentals=int(B * h * S * S),
        bytes_accessed=int(B * S * D * q_itm
                           + 2 * B * S * D * 2 * (S // tq)
                           + B * S * S * m_itm
                           + 2 * D * D * 2
                           + B * S * D * q_itm))
    return pl.pallas_call(
        functools.partial(_attn_kernel, h=h, d_k=d_k),
        out_shape=jax.ShapeDtypeStruct((B, S, D), q.dtype),
        grid_spec=pltpu.PrefetchScalarGridSpec(
            num_scalar_prefetch=0,
            grid=(B, S // tq),
            in_specs=[
                pl.BlockSpec((None, tq, D), lambda b, i: (b, i, 0)),         # q
                pl.BlockSpec((None, h, S, d_k), lambda b, i: (b, 0, 0, 0)),  # Kp
                pl.BlockSpec((None, h, S, d_k), lambda b, i: (b, 0, 0, 0)),  # Vp
                pl.BlockSpec((None, tq, S), lambda b, i: (b, i, 0)),         # mask
                pl.BlockSpec((D, D), lambda b, i: (0, 0)),                   # wq*scale
                pl.BlockSpec((h, d_k, D), lambda b, i: (0, 0, 0)),           # Wo.T per head
            ],
            out_specs=pl.BlockSpec((None, tq, D), lambda b, i: (b, i, 0)),
            scratch_shapes=[pltpu.VMEM((h, tq, d_k), bf16)]),
        compiler_params=pltpu.CompilerParams(
            dimension_semantics=("parallel", "parallel"),
            vmem_limit_bytes=vmem),
        cost_estimate=cost,
    )(q, kp, vp, mask, wq_t, wo_h)


# ---------------------------------------------------------------------------
# Pure-JAX f32 reference mirroring the PyTorch forward (eval mode).
# ---------------------------------------------------------------------------
def _reference(q, k, v, mask, wq, wk, wv, wo, *, h):
    B, S, D = q.shape
    d_k = D // h
    Q = (q @ wq.T).reshape(B, S, h, d_k).transpose(0, 2, 1, 3)
    K = (k @ wk.T).reshape(B, S, h, d_k).transpose(0, 2, 1, 3)
    V = (v @ wv.T).reshape(B, S, h, d_k).transpose(0, 2, 1, 3)
    scores = jnp.einsum("bhqd,bhkd->bhqk", Q, K) / math.sqrt(d_k)
    scores = jnp.where(mask[:, None, :, :] == 0, -1e9, scores)
    probs = jax.nn.softmax(scores, axis=-1)
    x = jnp.einsum("bhqk,bhkd->bhqd", probs, V)
    x = x.transpose(0, 2, 1, 3).reshape(B, S, D)
    return x @ wo.T


if __name__ == "__main__":
    B, S, D, H = 2, 8, 32, 4   # batch, seq, d_model, heads

    key = jax.random.PRNGKey(0)
    kq, kk, kv_, kwq, kwk, kwv, kwo = jax.random.split(key, 7)

    q = jax.random.normal(kq, (B, S, D), jnp.float32)
    k = jax.random.normal(kk, (B, S, D), jnp.float32)
    v = jax.random.normal(kv_, (B, S, D), jnp.float32)

    # Causal mask, broadcast over heads (1 = keep, 0 = mask), built as int8
    # directly so no extra conversion pass is needed before the kernel.
    mask = jnp.broadcast_to(jnp.tril(jnp.ones((S, S), jnp.int8)), (B, S, S))

    # Deterministic "nn.Linear" style init: U(-1/sqrt(D), 1/sqrt(D)), no bias.
    bound = 1.0 / math.sqrt(D)
    wq = jax.random.uniform(kwq, (D, D), jnp.float32, -bound, bound)
    wk = jax.random.uniform(kwk, (D, D), jnp.float32, -bound, bound)
    wv = jax.random.uniform(kwv, (D, D), jnp.float32, -bound, bound)
    wo = jax.random.uniform(kwo, (D, D), jnp.float32, -bound, bound)

    out = multi_head_attention(q, k, v, mask, wq, wk, wv, wo, h=H)
    out = jax.block_until_ready(out)

    ref = _reference(q, k, v, mask, wq, wk, wv, wo, h=H)
    assert out.shape == (B, S, D)
    # bf16 matmul operands + approx reciprocal -> loose tolerance vs f32 ref.
    assert jnp.allclose(out, ref, atol=2e-2, rtol=2e-2), (
        float(jnp.max(jnp.abs(out - ref))))
    print("KERNEL_OK")
</pallas_src>

<mosaic_0001>
module attributes {stable_mosaic.version = 11 : i64} {
  func.func @_kv_proj_kernel(%arg0: i32, %arg1: i32, %arg2: memref<1x8x32xf32, #tpu.memory_space<vmem>>, %arg3: memref<1x8x32xf32, #tpu.memory_space<vmem>>, %arg4: memref<32x32xbf16, #tpu.memory_space<vmem>>, %arg5: memref<32x32xbf16, #tpu.memory_space<vmem>>, %arg6: memref<1x4x8x8xbf16, #tpu.memory_space<vmem>>, %arg7: memref<1x4x8x8xbf16, #tpu.memory_space<vmem>>) attributes {dimension_semantics = [#tpu.dimension_semantics<parallel>, #tpu.dimension_semantics<parallel>], iteration_bounds = array<i64: 2, 1>, scalar_prefetch = 0 : i64, scratch_operands = 0 : i64, tpu.core_type = #tpu.core_type<tc>, window_params = [{transform_indices = @transform_0, window_bounds = array<i64: 1, 8, 32>}, {transform_indices = @transform_1, window_bounds = array<i64: 1, 8, 32>}, {pipeline_mode = #tpu.pipeline_mode<synchronous>, transform_indices = @transform_2, window_bounds = array<i64: 32, 32>}, {pipeline_mode = #tpu.pipeline_mode<synchronous>, transform_indices = @transform_3, window_bounds = array<i64: 32, 32>}, {transform_indices = @transform_4, window_bounds = array<i64: 1, 4, 8, 8>}, {transform_indices = @transform_5, window_bounds = array<i64: 1, 4, 8, 8>}]} {
    %c0 = arith.constant 0 : index
    %c0_0 = arith.constant 0 : index
    %c0_1 = arith.constant 0 : index
    %0 = vector.load %arg2[%c0, %c0_0, %c0_1] : memref<1x8x32xf32, #tpu.memory_space<vmem>>, vector<1x8x32xf32>
    %1 = vector.shape_cast %0 : vector<1x8x32xf32> to vector<8x32xf32>
    %2 = arith.truncf %1 : vector<8x32xf32> to vector<8x32xbf16>
    %c0_2 = arith.constant 0 : index
    %c0_3 = arith.constant 0 : index
    %c0_4 = arith.constant 0 : index
    %3 = vector.load %arg3[%c0_2, %c0_3, %c0_4] : memref<1x8x32xf32, #tpu.memory_space<vmem>>, vector<1x8x32xf32>
    %4 = vector.shape_cast %3 : vector<1x8x32xf32> to vector<8x32xf32>
    %5 = arith.truncf %4 : vector<8x32xf32> to vector<8x32xbf16>
    %c0_5 = arith.constant 0 : index
    %c0_6 = arith.constant 0 : index
    %6 = vector.load %arg4[%c0_5, %c0_6] : memref<32x32xbf16, #tpu.memory_space<vmem>>, vector<32x32xbf16>
    %cst = arith.constant dense<0.000000e+00> : vector<8x32xf32>
    %7 = tpu.matmul %2, %6, %cst {dimension_numbers = #tpu.dot_dimension_numbers<[1], [0], [0], [1], [0, 0, 1, 1], [], []>} : vector<8x32xbf16>, vector<32x32xbf16>, vector<8x32xf32> -> vector<8x32xf32>
    %c0_7 = arith.constant 0 : index
    %c0_8 = arith.constant 0 : index
    %8 = vector.load %arg5[%c0_7, %c0_8] : memref<32x32xbf16, #tpu.memory_space<vmem>>, vector<32x32xbf16>
    %cst_9 = arith.constant dense<0.000000e+00> : vector<8x32xf32>
    %9 = tpu.matmul %5, %8, %cst_9 {dimension_numbers = #tpu.dot_dimension_numbers<[1], [0], [0], [1], [0, 0, 1, 1], [], []>} : vector<8x32xbf16>, vector<32x32xbf16>, vector<8x32xf32> -> vector<8x32xf32>
    %10 = vector.extract_strided_slice %7 {offsets = [0, 0], sizes = [8, 8], strides = [1, 1]} : vector<8x32xf32> to vector<8x8xf32>
    %11 = arith.truncf %10 : vector<8x8xf32> to vector<8x8xbf16>
    %c0_10 = arith.constant 0 : index
    %c0_11 = arith.constant 0 : index
    %c0_12 = arith.constant 0 : index
    %c0_13 = arith.constant 0 : index
    %12 = vector.load %arg6[%c0_10, %c0_11, %c0_12, %c0_13] : memref<1x4x8x8xbf16, #tpu.memory_space<vmem>>, vector<1x1x8x8xbf16>
    %13 = vector.shape_cast %12 : vector<1x1x8x8xbf16> to vector<8x8xbf16>
    %14 = vector.shape_cast %11 : vector<8x8xbf16> to vector<1x1x8x8xbf16>
    tpu.vector_store %arg6[%c0_10, %c0_11, %c0_12, %c0_13], %14 {strides = array<i32>} : memref<1x4x8x8xbf16, #tpu.memory_space<vmem>>, vector<1x1x8x8xbf16>,
    %15 = vector.extract_strided_slice %9 {offsets = [0, 0], sizes = [8, 8], strides = [1, 1]} : vector<8x32xf32> to vector<8x8xf32>
    %16 = arith.truncf %15 : vector<8x8xf32> to vector<8x8xbf16>
    %c0_14 = arith.constant 0 : index
    %c0_15 = arith.constant 0 : index
    %c0_16 = arith.constant 0 : index
    %c0_17 = arith.constant 0 : index
    %17 = vector.load %arg7[%c0_14, %c0_15, %c0_16, %c0_17] : memref<1x4x8x8xbf16, #tpu.memory_space<vmem>>, vector<1x1x8x8xbf16>
    %18 = vector.shape_cast %17 : vector<1x1x8x8xbf16> to vector<8x8xbf16>
    %19 = vector.shape_cast %16 : vector<8x8xbf16> to vector<1x1x8x8xbf16>
    tpu.vector_store %arg7[%c0_14, %c0_15, %c0_16, %c0_17], %19 {strides = array<i32>} : memref<1x4x8x8xbf16, #tpu.memory_space<vmem>>, vector<1x1x8x8xbf16>,
    %20 = vector.extract_strided_slice %7 {offsets = [0, 8], sizes = [8, 8], strides = [1, 1]} : vector<8x32xf32> to vector<8x8xf32>
    %21 = arith.truncf %20 : vector<8x8xf32> to vector<8x8xbf16>
    %c0_18 = arith.constant 0 : index
    %c1 = arith.constant 1 : index
    %c0_19 = arith.constant 0 : index
    %c0_20 = arith.constant 0 : index
    %22 = vector.load %arg6[%c0_18, %c1, %c0_19, %c0_20] : memref<1x4x8x8xbf16, #tpu.memory_space<vmem>>, vector<1x1x8x8xbf16>
    %23 = vector.shape_cast %22 : vector<1x1x8x8xbf16> to vector<8x8xbf16>
    %24 = vector.shape_cast %21 : vector<8x8xbf16> to vector<1x1x8x8xbf16>
    tpu.vector_store %arg6[%c0_18, %c1, %c0_19, %c0_20], %24 {strides = array<i32>} : memref<1x4x8x8xbf16, #tpu.memory_space<vmem>>, vector<1x1x8x8xbf16>,
    %25 = vector.extract_strided_slice %9 {offsets = [0, 8], sizes = [8, 8], strides = [1, 1]} : vector<8x32xf32> to vector<8x8xf32>
    %26 = arith.truncf %25 : vector<8x8xf32> to vector<8x8xbf16>
    %c0_21 = arith.constant 0 : index
    %c1_22 = arith.constant 1 : index
    %c0_23 = arith.constant 0 : index
    %c0_24 = arith.constant 0 : index
    %27 = vector.load %arg7[%c0_21, %c1_22, %c0_23, %c0_24] : memref<1x4x8x8xbf16, #tpu.memory_space<vmem>>, vector<1x1x8x8xbf16>
    %28 = vector.shape_cast %27 : vector<1x1x8x8xbf16> to vector<8x8xbf16>
    %29 = vector.shape_cast %26 : vector<8x8xbf16> to vector<1x1x8x8xbf16>
    tpu.vector_store %arg7[%c0_21, %c1_22, %c0_23, %c0_24], %29 {strides = array<i32>} : memref<1x4x8x8xbf16, #tpu.memory_space<vmem>>, vector<1x1x8x8xbf16>,
    %30 = vector.extract_strided_slice %7 {offsets = [0, 16], sizes = [8, 8], strides = [1, 1]} : vector<8x32xf32> to vector<8x8xf32>
    %31 = arith.truncf %30 : vector<8x8xf32> to vector<8x8xbf16>
    %c0_25 = arith.constant 0 : index
    %c2 = arith.constant 2 : index
    %c0_26 = arith.constant 0 : index
    %c0_27 = arith.constant 0 : index
    %32 = vector.load %arg6[%c0_25, %c2, %c0_26, %c0_27] : memref<1x4x8x8xbf16, #tpu.memory_space<vmem>>, vector<1x1x8x8xbf16>
    %33 = vector.shape_cast %32 : vector<1x1x8x8xbf16> to vector<8x8xbf16>
    %34 = vector.shape_cast %31 : vector<8x8xbf16> to vector<1x1x8x8xbf16>
    tpu.vector_store %arg6[%c0_25, %c2, %c0_26, %c0_27], %34 {strides = array<i32>} : memref<1x4x8x8xbf16, #tpu.memory_space<vmem>>, vector<1x1x8x8xbf16>,
    %35 = vector.extract_strided_slice %9 {offsets = [0, 16], sizes = [8, 8], strides = [1, 1]} : vector<8x32xf32> to vector<8x8xf32>
    %36 = arith.truncf %35 : vector<8x8xf32> to vector<8x8xbf16>
    %c0_28 = arith.constant 0 : index
    %c2_29 = arith.constant 2 : index
    %c0_30 = arith.constant 0 : index
    %c0_31 = arith.constant 0 : index
    %37 = vector.load %arg7[%c0_28, %c2_29, %c0_30, %c0_31] : memref<1x4x8x8xbf16, #tpu.memory_space<vmem>>, vector<1x1x8x8xbf16>
    %38 = vector.shape_cast %37 : vector<1x1x8x8xbf16> to vector<8x8xbf16>
    %39 = vector.shape_cast %36 : vector<8x8xbf16> to vector<1x1x8x8xbf16>
    tpu.vector_store %arg7[%c0_28, %c2_29, %c0_30, %c0_31], %39 {strides = array<i32>} : memref<1x4x8x8xbf16, #tpu.memory_space<vmem>>, vector<1x1x8x8xbf16>,
    %40 = vector.extract_strided_slice %7 {offsets = [0, 24], sizes = [8, 8], strides = [1, 1]} : vector<8x32xf32> to vector<8x8xf32>
    %41 = arith.truncf %40 : vector<8x8xf32> to vector<8x8xbf16>
    %c0_32 = arith.constant 0 : index
    %c3 = arith.constant 3 : index
    %c0_33 = arith.constant 0 : index
    %c0_34 = arith.constant 0 : index
    %42 = vector.load %arg6[%c0_32, %c3, %c0_33, %c0_34] : memref<1x4x8x8xbf16, #tpu.memory_space<vmem>>, vector<1x1x8x8xbf16>
    %43 = vector.shape_cast %42 : vector<1x1x8x8xbf16> to vector<8x8xbf16>
    %44 = vector.shape_cast %41 : vector<8x8xbf16> to vector<1x1x8x8xbf16>
    tpu.vector_store %arg6[%c0_32, %c3, %c0_33, %c0_34], %44 {strides = array<i32>} : memref<1x4x8x8xbf16, #tpu.memory_space<vmem>>, vector<1x1x8x8xbf16>,
    %45 = vector.extract_strided_slice %9 {offsets = [0, 24], sizes = [8, 8], strides = [1, 1]} : vector<8x32xf32> to vector<8x8xf32>
    %46 = arith.truncf %45 : vector<8x8xf32> to vector<8x8xbf16>
    %c0_35 = arith.constant 0 : index
    %c3_36 = arith.constant 3 : index
    %c0_37 = arith.constant 0 : index
    %c0_38 = arith.constant 0 : index
    %47 = vector.load %arg7[%c0_35, %c3_36, %c0_37, %c0_38] : memref<1x4x8x8xbf16, #tpu.memory_space<vmem>>, vector<1x1x8x8xbf16>
    %48 = vector.shape_cast %47 : vector<1x1x8x8xbf16> to vector<8x8xbf16>
    %49 = vector.shape_cast %46 : vector<8x8xbf16> to vector<1x1x8x8xbf16>
    tpu.vector_store %arg7[%c0_35, %c3_36, %c0_37, %c0_38], %49 {strides = array<i32>} : memref<1x4x8x8xbf16, #tpu.memory_space<vmem>>, vector<1x1x8x8xbf16>,
    return
  }
  func.func @transform_0(%arg0: i32, %arg1: i32) -> (i32, i32, i32) {
    %c0_i32 = arith.constant 0 : i32
    %c0_i32_0 = arith.constant 0 : i32
    return %arg0, %arg1, %c0_i32 : i32, i32, i32
  }
  func.func @transform_1(%arg0: i32, %arg1: i32) -> (i32, i32, i32) {
    %c0_i32 = arith.constant 0 : i32
    %c0_i32_0 = arith.constant 0 : i32
    return %arg0, %arg1, %c0_i32 : i32, i32, i32
  }
  func.func @transform_2(%arg0: i32, %arg1: i32) -> (i32, i32) {
    %c0_i32 = arith.constant 0 : i32
    %c0_i32_0 = arith.constant 0 : i32
    %c0_i32_1 = arith.constant 0 : i32
    return %c0_i32, %c0_i32_0 : i32, i32
  }
  func.func @transform_3(%arg0: i32, %arg1: i32) -> (i32, i32) {
    %c0_i32 = arith.constant 0 : i32
    %c0_i32_0 = arith.constant 0 : i32
    %c0_i32_1 = arith.constant 0 : i32
    return %c0_i32, %c0_i32_0 : i32, i32
  }
  func.func @transform_4(%arg0: i32, %arg1: i32) -> (i32, i32, i32, i32) {
    %c0_i32 = arith.constant 0 : i32
    %c0_i32_0 = arith.constant 0 : i32
    %c0_i32_1 = arith.constant 0 : i32
    return %arg0, %c0_i32, %arg1, %c0_i32_0 : i32, i32, i32, i32
  }
  func.func @transform_5(%arg0: i32, %arg1: i32) -> (i32, i32, i32, i32) {
    %c0_i32 = arith.constant 0 : i32
    %c0_i32_0 = arith.constant 0 : i32
    %c0_i32_1 = arith.constant 0 : i32
    return %arg0, %c0_i32, %arg1, %c0_i32_0 : i32, i32, i32, i32
  }
}

</mosaic_0001>

<llo_original>
// kernel: tpu_custom_call.1
$region0: #{tpu_custom_call.1}
  #allocation0 [shape = 'u32[]', space=smem, size = 0x4, offset = 0x4, fixed_abs, tag = 'smem constant byte address 0x4 - core index']
  #allocation1 [shape = 'u32[72,128]{1,0:T(1,128)}', space=vmem, size = 0x9000, scoped, tag = 'internal scratch']
  %s0 = inlined_call_operand.hbm [shape: f32[2,8,32], index: 0, kind: input, shape index: {}]
  %s1 = inlined_call_operand.hbm [shape: f32[2,8,32], index: 1, kind: input, shape index: {}]
  %s2 = inlined_call_operand.hbm [shape: bf16[32,32], index: 2, kind: input, shape index: {}]
  %s3 = inlined_call_operand.hbm [shape: bf16[32,32], index: 3, kind: input, shape index: {}]
  %s4 = inlined_call_operand.hbm [shape: bf16[2,4,8,8], index: 4, kind: output, shape index: {0}]
  %s5 = inlined_call_operand.hbm [shape: bf16[2,4,8,8], index: 5, kind: output, shape index: {1}]
  %6 = xla_tuple %s4, %s5
  %s7 = sld [smem:[#allocation0]]
  $region73: #{tpu_custom_call.1} parent=0
    _
  %s9 = ssub.s32 1, %s7
  %s10 = scalar_select 0, %s9, %s7
  $region1: #{tpu_custom_call.1} parent=0
    #allocation2 [shape = 'u8[8192]{0}', space=vmem, size = 0x2000, scoped, tag = 'input window, operand 0']
    #allocation3 [shape = 's32[2]{0}', space=sflag, size = 0x8, scoped, tag = 'scoped memory for tpu_custom_call.1']
    #allocation4 [shape = 's32[2]{0}', space=sflag, size = 0x8, scoped, tag = 'scoped memory for tpu_custom_call.1']
    #allocation5 [shape = 'u8[8192]{0}', space=vmem, size = 0x2000, scoped, tag = 'input window, operand 1']
    #allocation6 [shape = 's32[2]{0}', space=sflag, size = 0x8, scoped, tag = 'scoped memory for tpu_custom_call.1']
    #allocation7 [shape = 'u8[8192]{0}', space=vmem, size = 0x2000, scoped, tag = 'input window, operand 2, single buffered']
    #allocation8 [shape = 'u8[8192]{0}', space=vmem, size = 0x2000, scoped, tag = 'input window, operand 3, single buffered']
    #allocation9 [shape = 's32[1]{0}', space=sflag, size = 0x4, scoped, tag = 'scoped memory for tpu_custom_call.1']
    #allocation10 [shape = 'u8[16384]{0}', space=vmem, size = 0x4000, scoped, tag = 'output window, operand 0']
    #allocation11 [shape = 'u8[16384]{0}', space=vmem, size = 0x4000, scoped, tag = 'output window, operand 1']
    #allocation12 [shape = 's32[2]{0}', space=sflag, size = 0x8, scoped, tag = 'scoped memory for tpu_custom_call.1']
    %11 = vsyncpa [#allocation3], 0
    %s12 = scalar_lea.sflag [#allocation3], 1
    %13 = vsyncpa %s12, 0
    %14 = vsyncpa [#allocation6], 0
    %s15 = scalar_lea.sflag [#allocation6], 1
    %16 = vsyncpa %s15, 0
    %17 = vsyncpa [#allocation9], 0
    %18 = vsyncpa [#allocation4], 0
    %s19 = scalar_lea.sflag [#allocation4], 1
    %20 = vsyncpa %s19, 0
    %21 = vsyncpa [#allocation12], 0
    %s22 = scalar_lea.sflag [#allocation12], 1
    %23 = vsyncpa %s22, 0
    loop: start=0, step=1, limit=4
    $region2: #{tpu_custom_call.1} parent=1 // loop_pre_header
      _
    $region3: #{tpu_custom_call.1} parent=1 // loop_header
      %s25 = sphi 0, %s29
      %p26 = scmp.ge.s32.totalorder %s25, 4
      %s32 = sphi 0, %s44
      %s33 = sphi 0, %s40
      %s34 = sphi 0, %s32
      %s35 = sphi 0, %s33
      %s36 = sphi 0, %s34
      %s37 = sphi 0, %s35
      %s49 = sphi 0, %s51
      %s52 = sphi 0, %s49
      %s53 = sphi 0, %s52
      %s69 = sphi 0, %s53
      %s77 = sphi 0, %s79
      %s80 = sphi 0, %s77
      %s81 = sphi 0, %s80
      %s97 = sphi 0, %s81
      %s101 = sphi 0, %s101
      %s103 = sphi 0, %s101
      %s104 = sphi 0, %s103
      %s118 = sphi 0, %s104
      %s122 = sphi 0, %s122
      %s124 = sphi 0, %s122
      %s125 = sphi 0, %s124
      %s139 = sphi 0, %s125
      %s147 = sphi 0, %s149
      %s150 = sphi 0, %s147
      %s151 = sphi 0, %s150
      %s167 = sphi 0, %s151
      %s175 = sphi 0, %s177
      %s178 = sphi 0, %s175
      %s179 = sphi 0, %s178
      %s195 = sphi 0, %s179
    $region4: #{tpu_custom_call.1} parent=1 // loop_header_branch
      %28 = sbr.rel (%p26) target = $region8
    $region5: #{tpu_custom_call.1} parent=1 // loop_body
      %s30 = ssub.s32 %s25, 1
      %s31 = ssub.s32 %s25, 2
      %s38 = sadd.s32 1, %s33
      %p39 = scmp.ge.s32.totalorder %s38, 1
      %s40 = scalar_select %p39, 0, %s38
      %s41 = sadd.s32 1, %s32
      %s42 = scalar_select %p39, %s41, %s32
      %p43 = scmp.ge.s32.totalorder %s42, 2
      %s44 = scalar_select %p43, 0, %s42
      %s45 = ssub.s32 %s32, %s44
      %s46 = ssub.s32 %s33, %s40
      %s47 = sor.u32 %s45, %s46
      %p48 = scmp.eq.s32.totalorder %s47, 0
      %s50 = sadd.s32 %s49, 1
      %s51 = scalar_select %p48, %s49, %s50
      %p54 = pneg %p48
      %p55 = scmp.eq.s32.totalorder %s25, 1
      %p56 = por %p54, %p55
      %p57 = scmp.ne.s32.totalorder %s49, %s52
      %p58 = scmp.eq.s32.totalorder %s25, 0
      %p59 = por %p57, %p58
      %p60 = scmp.ne.s32.totalorder %s49, %s52
      %p61 = scmp.eq.s32.totalorder %s30, 1
      %p62 = por %p60, %p61
      %p63 = scmp.ne.s32.totalorder %s52, %s53
      %p64 = scmp.eq.s32.totalorder %s30, 0
      %p65 = por %p63, %p64
      %p66 = scmp.ne.s32.totalorder %s52, %s53
      %p67 = scmp.eq.s32.totalorder %s31, 1
      %p68 = por %p66, %p67
      %p70 = scmp.ne.s32.totalorder %s53, %s69
      %p71 = scmp.eq.s32.totalorder %s31, 0
      %p72 = por %p70, %p71
      %s73 = ssub.s32 %s32, %s44
      %s74 = ssub.s32 %s33, %s40
      %s75 = sor.u32 %s73, %s74
      %p76 = scmp.eq.s32.totalorder %s75, 0
      %s78 = sadd.s32 %s77, 1
      %s79 = scalar_select %p76, %s77, %s78
      %p82 = pneg %p76
      %p83 = scmp.eq.s32.totalorder %s25, 1
      %p84 = por %p82, %p83
      %p85 = scmp.ne.s32.totalorder %s77, %s80
      %p86 = scmp.eq.s32.totalorder %s25, 0
      %p87 = por %p85, %p86
      %p88 = scmp.ne.s32.totalorder %s77, %s80
      %p89 = scmp.eq.s32.totalorder %s30, 1
      %p90 = por %p88, %p89
      %p91 = scmp.ne.s32.totalorder %s80, %s81
      %p92 = scmp.eq.s32.totalorder %s30, 0
      %p93 = por %p91, %p92
      %p94 = scmp.ne.s32.totalorder %s80, %s81
      %p95 = scmp.eq.s32.totalorder %s31, 1
      %p96 = por %p94, %p95
      %p98 = scmp.ne.s32.totalorder %s81, %s97
      %p99 = scmp.eq.s32.totalorder %s31, 0
      %p100 = por %p98, %p99
      %s102 = sadd.s32 %s101, 1
      %p105 = scmp.eq.s32.totalorder %s25, 1
      %p106 = scmp.ne.s32.totalorder %s101, %s103
      %p107 = scmp.eq.s32.totalorder %s25, 0
      %p108 = por %p106, %p107
      %p109 = scmp.ne.s32.totalorder %s101, %s103
      %p110 = scmp.eq.s32.totalorder %s30, 1
      %p111 = por %p109, %p110
      %p112 = scmp.ne.s32.totalorder %s103, %s104
      %p113 = scmp.eq.s32.totalorder %s30, 0
      %p114 = por %p112, %p113
      %p115 = scmp.ne.s32.totalorder %s103, %s104
      %p116 = scmp.eq.s32.totalorder %s31, 1
      %p117 = por %p115, %p116
      %p119 = scmp.ne.s32.totalorder %s104, %s118
      %p120 = scmp.eq.s32.totalorder %s31, 0
      %p121 = por %p119, %p120
      %s123 = sadd.s32 %s122, 1
      %p126 = scmp.eq.s32.totalorder %s25, 1
      %p127 = scmp.ne.s32.totalorder %s122, %s124
      %p128 = scmp.eq.s32.totalorder %s25, 0
      %p129 = por %p127, %p128
      %p130 = scmp.ne.s32.totalorder %s122, %s124
      %p131 = scmp.eq.s32.totalorder %s30, 1
      %p132 = por %p130, %p131
      %p133 = scmp.ne.s32.totalorder %s124, %s125
      %p134 = scmp.eq.s32.totalorder %s30, 0
      %p135 = por %p133, %p134
      %p136 = scmp.ne.s32.totalorder %s124, %s125
      %p137 = scmp.eq.s32.totalorder %s31, 1
      %p138 = por %p136, %p137
      %p140 = scmp.ne.s32.totalorder %s125, %s139
      %p141 = scmp.eq.s32.totalorder %s31, 0
      %p142 = por %p140, %p141
      %s143 = ssub.s32 %s32, %s44
      %s144 = ssub.s32 %s33, %s40
      %s145 = sor.u32 %s143, %s144
      %p146 = scmp.eq.s32.totalorder %s145, 0
      %s148 = sadd.s32 %s147, 1
      %s149 = scalar_select %p146, %s147, %s148
      %p152 = pneg %p146
      %p153 = scmp.eq.s32.totalorder %s25, 1
      %p154 = por %p152, %p153
      %p155 = scmp.ne.s32.totalorder %s147, %s150
      %p156 = scmp.eq.s32.totalorder %s25, 0
      %p157 = por %p155, %p156
      %p158 = scmp.ne.s32.totalorder %s147, %s150
      %p159 = scmp.eq.s32.totalorder %s30, 1
      %p160 = por %p158, %p159
      %p161 = scmp.ne.s32.totalorder %s150, %s151
      %p162 = scmp.eq.s32.totalorder %s30, 0
      %p163 = por %p161, %p162
      %p164 = scmp.ne.s32.totalorder %s150, %s151
      %p165 = scmp.eq.s32.totalorder %s31, 1
      %p166 = por %p164, %p165
      %p168 = scmp.ne.s32.totalorder %s151, %s167
      %p169 = scmp.eq.s32.totalorder %s31, 0
      %p170 = por %p168, %p169
      %s171 = ssub.s32 %s32, %s44
      %s172 = ssub.s32 %s33, %s40
      %s173 = sor.u32 %s171, %s172
      %p174 = scmp.eq.s32.totalorder %s173, 0
      %s176 = sadd.s32 %s175, 1
      %s177 = scalar_select %p174, %s175, %s176
      %p180 = pneg %p174
      %p181 = scmp.eq.s32.totalorder %s25, 1
      %p182 = por %p180, %p181
      %p183 = scmp.ne.s32.totalorder %s175, %s178
      %p184 = scmp.eq.s32.totalorder %s25, 0
      %p185 = por %p183, %p184
      %p186 = scmp.ne.s32.totalorder %s175, %s178
      %p187 = scmp.eq.s32.totalorder %s30, 1
      %p188 = por %p186, %p187
      %p189 = scmp.ne.s32.totalorder %s178, %s179
      %p190 = scmp.eq.s32.totalorder %s30, 0
      %p191 = por %p189, %p190
      %p192 = scmp.ne.s32.totalorder %s178, %s179
      %p193 = scmp.eq.s32.totalorder %s31, 1
      %p194 = por %p192, %p193
      %p196 = scmp.ne.s32.totalorder %s179, %s195
      %p197 = scmp.eq.s32.totalorder %s31, 0
      %p198 = por %p196, %p197
      %p199 = scmp.le.s32.totalorder 1, %s25
      %p200 = scmp.lt.s32.totalorder %s25, 3
      %p201 = pnand %p199, %p200
      %p202 = pneg %p201
      // Predicated region
      $region9: #{tpu_custom_call.1} parent=5 // pred_check
        _
      $region10: #{tpu_custom_call.1} parent=5 // pred_check_branch
        %204 = sbr.rel (%p201) target = $region12
      $region11: #{tpu_custom_call.1} parent=5 // pred_region
        %s205 = ssub.s32 %s25, 1
        // Predicated region
        $region13: #{tpu_custom_call.1} parent=11 // pred_check
          %p206 = pneg %p114
        $region14: #{tpu_custom_call.1} parent=11 // pred_check_branch
          %208 = sbr.rel (%p206) target = $region16
        $region15: #{tpu_custom_call.1} parent=11 // pred_region
          %210 = vsyncadd [#allocation6], 0
          %s211 = sshll.u32 %s2, 4
          %s212 = int_to_ptr.hbm [resolvable:$true] %s211
          %s213 = sshll.u32 [#allocation7], 4
          %s214 = int_to_ptr.vmem [resolvable:$true] %s213
          %219 = dma.hbm_to_vmem [thread:$0]  %s212, 256, %s214, [#allocation6], 64, 64, 4
        $region16: #{tpu_custom_call.1} parent=11 // pred_fallthru
          _
        // Predicated region
        $region17: #{tpu_custom_call.1} parent=11 // pred_check
          %p220 = pneg %p135
        $region18: #{tpu_custom_call.1} parent=11 // pred_check_branch
          %222 = sbr.rel (%p220) target = $region20
        $region19: #{tpu_custom_call.1} parent=11 // pred_region
          %224 = vsyncadd [#allocation9], 0
          %s225 = sshll.u32 %s3, 4
          %s226 = int_to_ptr.hbm [resolvable:$true] %s225
          %s227 = sshll.u32 [#allocation8], 4
          %s228 = int_to_ptr.vmem [resolvable:$true] %s227
          %233 = dma.hbm_to_vmem [thread:$0]  %s226, 256, %s228, [#allocation9], 64, 64, 4
        $region20: #{tpu_custom_call.1} parent=11 // pred_fallthru
          _
      $region12: #{tpu_custom_call.1} parent=5 // pred_fallthru
        _
      %p234 = scmp.lt.s32.totalorder %s25, 2
      // Predicated region
      $region21: #{tpu_custom_call.1} parent=5 // pred_check
        %p235 = pneg %p234
      $region22: #{tpu_custom_call.1} parent=5 // pred_check_branch
        %237 = sbr.rel (%p235) target = $region24
      $region23: #{tpu_custom_call.1} parent=5 // pred_region
        // Predicated region
        $region25: #{tpu_custom_call.1} parent=23 // pred_check
          %p238 = pneg %p59
        $region26: #{tpu_custom_call.1} parent=23 // pred_check_branch
          %240 = sbr.rel (%p238) target = $region28
        $region27: #{tpu_custom_call.1} parent=23 // pred_region
          %s241 = sand.u32 %s49, 1
          %s242 = scalar_lea.sflag [#allocation3], %s241
          %s243 = sand.u32 %s49, 1
          %s244 = smul.addr %s243, 8
          %s245 = scalar_lea.vmem [#allocation2], %s244
          %247 = vsyncadd %s242, 0
          %s248 = sadd.s32 %s33, %s32
          %s249 = smul.addr %s248, 8
          %s250 = scalar_lea.hbm %s0, %s249
          %s252 = sshll.u32 %s250, 4
          %s253 = int_to_ptr.hbm [resolvable:$true] %s252
          %s254 = sshll.u32 %s245, 4
          %s255 = int_to_ptr.vmem [resolvable:$true] %s254
          %257 = dma.hbm_to_vmem [thread:$0]  %s253, 128, %s255, %s242
        $region28: #{tpu_custom_call.1} parent=23 // pred_fallthru
          _
        // Predicated region
        $region29: #{tpu_custom_call.1} parent=23 // pred_check
          %p258 = pneg %p87
        $region30: #{tpu_custom_call.1} parent=23 // pred_check_branch
          %260 = sbr.rel (%p258) target = $region32
        $region31: #{tpu_custom_call.1} parent=23 // pred_region
          %s261 = sand.u32 %s25, 1
          %s262 = scalar_lea.sflag [#allocation6], %s261
          %s263 = sand.u32 %s77, 1
          %s264 = smul.addr %s263, 8
          %s265 = scalar_lea.vmem [#allocation5], %s264
          %267 = vsyncadd %s262, 0
          %s268 = sadd.s32 %s33, %s32
          %s269 = smul.addr %s268, 8
          %s270 = scalar_lea.hbm %s1, %s269
          %s272 = sshll.u32 %s270, 4
          %s273 = int_to_ptr.hbm [resolvable:$true] %s272
          %s274 = sshll.u32 %s265, 4
          %s275 = int_to_ptr.vmem [resolvable:$true] %s274
          %277 = dma.hbm_to_vmem [thread:$0]  %s273, 128, %s275, %s262
        $region32: #{tpu_custom_call.1} parent=23 // pred_fallthru
          _
      $region24: #{tpu_custom_call.1} parent=5 // pred_fallthru
        _
      %p278 = scmp.le.s32.totalorder 1, %s25
      %p279 = scmp.lt.s32.totalorder %s25, 3
      %p280 = pnand %p278, %p279
      %p281 = pneg %p280
      // Predicated region
      $region33: #{tpu_custom_call.1} parent=5 // pred_check
        _
      $region34: #{tpu_custom_call.1} parent=5 // pred_check_branch
        %283 = sbr.rel (%p280) target = $region36
      $region35: #{tpu_custom_call.1} parent=5 // pred_region
        %s284 = ssub.s32 %s25, 1
        %s285 = sand.u32 %s52, 1
        %s286 = scalar_lea.sflag [#allocation3], %s285
        %s287 = sand.u32 %s52, 1
        %s288 = smul.addr %s287, 8
        %s289 = scalar_lea.vmem [#allocation2], %s288
        // Predicated region
        $region37: #{tpu_custom_call.1} parent=35 // pred_check
          %p290 = pneg %p65
        $region38: #{tpu_custom_call.1} parent=35 // pred_check_branch
          %292 = sbr.rel (%p290) target = $region40
        $region39: #{tpu_custom_call.1} parent=35 // pred_region
          %294 = dma.done %s286, 128
        $region40: #{tpu_custom_call.1} parent=35 // pred_fallthru
          _
        %s295 = sand.u32 %s30, 1
        %s296 = scalar_lea.sflag [#allocation6], %s295
        %s297 = sand.u32 %s80, 1
        %s298 = smul.addr %s297, 8
        %s299 = scalar_lea.vmem [#allocation5], %s298
        // Predicated region
        $region41: #{tpu_custom_call.1} parent=35 // pred_check
          %p300 = pneg %p93
        $region42: #{tpu_custom_call.1} parent=35 // pred_check_branch
          %302 = sbr.rel (%p300) target = $region44
        $region43: #{tpu_custom_call.1} parent=35 // pred_region
          %304 = dma.done %s296, 128
        $region44: #{tpu_custom_call.1} parent=35 // pred_fallthru
          _
        // Predicated region
        $region45: #{tpu_custom_call.1} parent=35 // pred_check
          %p305 = pneg %p114
        $region46: #{tpu_custom_call.1} parent=35 // pred_check_branch
          %307 = sbr.rel (%p305) target = $region48
        $region47: #{tpu_custom_call.1} parent=35 // pred_region
          %309 = dma.done [#allocation6], 256
        $region48: #{tpu_custom_call.1} parent=35 // pred_fallthru
          _
        // Predicated region
        $region49: #{tpu_custom_call.1} parent=35 // pred_check
          %p310 = pneg %p135
        $region50: #{tpu_custom_call.1} parent=35 // pred_check_branch
          %312 = sbr.rel (%p310) target = $region52
        $region51: #{tpu_custom_call.1} parent=35 // pred_region
          %314 = dma.done [#allocation9], 256
        $region52: #{tpu_custom_call.1} parent=35 // pred_fallthru
          _
        %s315 = sand.u32 %s52, 1
        %s316 = scalar_lea.sflag [#allocation3], %s315
        %s317 = sand.u32 %s52, 1
        %s318 = smul.addr %s317, 8
        %s319 = scalar_lea.vmem [#allocation2], %s318
        %p320 = pneg %p65
        %p321 = pneg %p62
        %s322 = sand.u32 %s30, 1
        %s323 = scalar_lea.sflag [#allocation6], %s322
        %s324 = sand.u32 %s80, 1
        %s325 = smul.addr %s324, 8
        %s326 = scalar_lea.vmem [#allocation5], %s325
        %p327 = pneg %p93
        %p328 = pneg %p90
        %p329 = pneg %p114
        %p330 = pneg %p111
        %p331 = pneg %p135
        %p332 = pneg %p132
        %p333 = pneg %p163
        %p334 = pneg %p160
        %s335 = sand.u32 %s150, 1
        %s336 = scalar_lea.sflag [#allocation4], %s335
        %s337 = sand.u32 %s150, 1
        %s338 = smul.addr %s337, 16
        %s339 = scalar_lea.vmem [#allocation10], %s338
        %p340 = pneg %p191
        %p341 = pneg %p188
        %s342 = sand.u32 %s178, 1
        %s343 = scalar_lea.sflag [#allocation12], %s342
        %s344 = sand.u32 %s178, 1
        %s345 = smul.addr %s344, 16
        %s346 = scalar_lea.vmem [#allocation11], %s345
        %v348 = vld [vmem:[%s289] sm:$0xff]
        %v349 = vpack.c.bf16 %v348, %v348
        %v350 = vld [vmem:[%s299] sm:$0xff]
        %v351 = vpack.c.bf16 %v350, %v350
        %v352 = vld [vmem:[#allocation7] sm:$0xf]
        %v353 = vld [vmem:[#allocation7 + $0x4] sm:$0xf]
        %v354 = vld [vmem:[#allocation7 + $0x8] sm:$0xf]
        %v355 = vld [vmem:[#allocation7 + $0xc] sm:$0xf]
        %v360 = vunpack.c.l.b16 %v352
        %v361 = vunpack.c.l.b16 %v353
        %v362 = vunpack.c.l.b16 %v354
        %v363 = vunpack.c.l.b16 %v355
        %v364 = vpack.c.b16 %v361, %v360
        %v365 = vpack.c.b16 %v363, %v362
        %vm368 = vcmask 261120
        %v370 = vsel %vm368, %v349, 0
        %372 = vmatpush.bf16.msra.mxu0 0
        %373 = vmatpush.bf16.msra.mxu0 0
        %374 = vmatpush.bf16.msra.mxu0 0
        %375 = vmatpush.bf16.msra.mxu0 0
        %376 = vmatpush.bf16.msra.mxu0 0
        %377 = vmatpush.bf16.msra.mxu0 0
        %378 = vmatpush.bf16.msra.mxu0 %v365
        %379 = vmatpush.bf16.msra.mxu0 %v364
        %380 = vmatmul.bf16.gmra.mxu0 %v370
        %v381 = vpop.f32.mrf.mxu0
        %v382 = vadd.f32 0.0, %v381
        %v383 = vpop.f32.mrf.mxu0
        %384 = vdwg.mxu0
        %v385 = vld [vmem:[#allocation8] sm:$0xf]
        %v386 = vld [vmem:[#allocation8 + $0x4] sm:$0xf]
        %v387 = vld [vmem:[#allocation8 + $0x8] sm:$0xf]
        %v388 = vld [vmem:[#allocation8 + $0xc] sm:$0xf]
        %v393 = vunpack.c.l.b16 %v385
        %v394 = vunpack.c.l.b16 %v386
        %v395 = vunpack.c.l.b16 %v387
        %v396 = vunpack.c.l.b16 %v388
        %v397 = vpack.c.b16 %v394, %v393
        %v398 = vpack.c.b16 %v396, %v395
        %v402 = vsel %vm368, %v351, 0
        %404 = vmatpush.bf16.msra.mxu0 0
        %405 = vmatpush.bf16.msra.mxu0 0
        %406 = vmatpush.bf16.msra.mxu0 0
        %407 = vmatpush.bf16.msra.mxu0 0
        %408 = vmatpush.bf16.msra.mxu0 0
        %409 = vmatpush.bf16.msra.mxu0 0
        %410 = vmatpush.bf16.msra.mxu0 %v398
        %411 = vmatpush.bf16.msra.mxu0 %v397
        %412 = vmatmul.bf16.gmra.mxu0 %v402
        %v413 = vpop.f32.mrf.mxu0
        %v414 = vadd.f32 0.0, %v413
        %v415 = vpop.f32.mrf.mxu0
        %416 = vdwg.mxu0
        %v417 = vpack.c.bf16 %v382, %v382
        %vm418 = vcmask 60416
        %419 = vst.msk [vmem:[%s339] sm:$0xf] %vm418, %v417
        %v420 = vpack.c.bf16 %v414, %v414
        %421 = vst.msk [vmem:[%s346] sm:$0xf] %vm418, %v420
        %423 = vrot.lane.b32.xlu0 %v417, 120
        %v424 = vpop.permute.xlu0 %423
        %s426 = scalar_lea.vmem %s339, 4 [#allocation10]
        %427 = vst.msk [vmem:[%s426] sm:$0xf] %vm418, %v424
        %429 = vrot.lane.b32.xlu0 %v420, 120
        %v430 = vpop.permute.xlu0 %429
        %s432 = scalar_lea.vmem %s346, 4 [#allocation11]
        %433 = vst.msk [vmem:[%s432] sm:$0xf] %vm418, %v430
        %434 = vrot.lane.b32.xlu0 %v417, 112
        %v435 = vpop.permute.xlu0 %434
        %s437 = scalar_lea.vmem %s339, 8 [#allocation10]
        %438 = vst.msk [vmem:[%s437] sm:$0xf] %vm418, %v435
        %439 = vrot.lane.b32.xlu0 %v420, 112
        %v440 = vpop.permute.xlu0 %439
        %s442 = scalar_lea.vmem %s346, 8 [#allocation11]
        %443 = vst.msk [vmem:[%s442] sm:$0xf] %vm418, %v440
        %444 = vrot.lane.b32.xlu0 %v417, 104
        %v445 = vpop.permute.xlu0 %444
        %s447 = scalar_lea.vmem %s339, 12 [#allocation10]
        %448 = vst.msk [vmem:[%s447] sm:$0xf] %vm418, %v445
        %449 = vrot.lane.b32.xlu0 %v420, 104
        %v450 = vpop.permute.xlu0 %449
        %s452 = scalar_lea.vmem %s346, 12 [#allocation11]
        %453 = vst.msk [vmem:[%s452] sm:$0xf] %vm418, %v450
        %s454 = sand.u32 %s150, 1
        %s455 = scalar_lea.sflag [#allocation4], %s454
        %s456 = sand.u32 %s150, 1
        %s457 = smul.addr %s456, 16
        %s458 = scalar_lea.vmem [#allocation10], %s457
        %s459 = sand.u32 %s178, 1
        %s460 = scalar_lea.sflag [#allocation12], %s459
        %s461 = sand.u32 %s178, 1
        %s462 = smul.addr %s461, 16
        %s463 = scalar_lea.vmem [#allocation11], %s462
        // Predicated region
        $region53: #{tpu_custom_call.1} parent=35 // pred_check
          %p464 = pneg %p160
        $region54: #{tpu_custom_call.1} parent=35 // pred_check_branch
          %466 = sbr.rel (%p464) target = $region56
        $region55: #{tpu_custom_call.1} parent=35 // pred_region
          %468 = vsyncadd %s455, 0
          %s469 = smul.addr %s34, 4
          %s470 = sadd.s32 %s35, %s469
          %s471 = smul.addr %s470, 4
          %s472 = scalar_lea.hbm %s4, %s471
          %s473 = sshll.u32 %s458, 4
          %s474 = int_to_ptr.vmem [resolvable:$true] %s473
          %s475 = sshll.u32 %s472, 4
          %s476 = int_to_ptr.hbm [resolvable:$true] %s475
          %481 = dma.vmem_to_hbm [thread:$0]  %s474, 256, %s476, %s455, 64, 64, 4
        $region56: #{tpu_custom_call.1} parent=35 // pred_fallthru
          _
        // Predicated region
        $region57: #{tpu_custom_call.1} parent=35 // pred_check
          %p482 = pneg %p188
        $region58: #{tpu_custom_call.1} parent=35 // pred_check_branch
          %484 = sbr.rel (%p482) target = $region60
        $region59: #{tpu_custom_call.1} parent=35 // pred_region
          %486 = vsyncadd %s460, 0
          %s487 = smul.addr %s34, 4
          %s488 = sadd.s32 %s35, %s487
          %s489 = smul.addr %s488, 4
          %s490 = scalar_lea.hbm %s5, %s489
          %s491 = sshll.u32 %s463, 4
          %s492 = int_to_ptr.vmem [resolvable:$true] %s491
          %s493 = sshll.u32 %s490, 4
          %s494 = int_to_ptr.hbm [resolvable:$true] %s493
          %499 = dma.vmem_to_hbm [thread:$0]  %s492, 256, %s494, %s460, 64, 64, 4
        $region60: #{tpu_custom_call.1} parent=35 // pred_fallthru
          _
      $region36: #{tpu_custom_call.1} parent=5 // pred_fallthru
        _
      %p500 = scmp.le.s32.totalorder 2, %s25
      // Predicated region
      $region61: #{tpu_custom_call.1} parent=5 // pred_check
        %p501 = pneg %p500
      $region62: #{tpu_custom_call.1} parent=5 // pred_check_branch
        %503 = sbr.rel (%p501) target = $region64
      $region63: #{tpu_custom_call.1} parent=5 // pred_region
        %s504 = ssub.s32 %s25, 2
        // Predicated region
        $region65: #{tpu_custom_call.1} parent=63 // pred_check
          %p505 = pneg %p166
        $region66: #{tpu_custom_call.1} parent=63 // pred_check_branch
          %507 = sbr.rel (%p505) target = $region68
        $region67: #{tpu_custom_call.1} parent=63 // pred_region
          %s508 = sand.u32 %s151, 1
          %s509 = scalar_lea.sflag [#allocation4], %s508
          %s510 = sand.u32 %s151, 1
          %s511 = smul.addr %s510, 16
          %s512 = scalar_lea.vmem [#allocation10], %s511
          %514 = dma.done %s509, 256
        $region68: #{tpu_custom_call.1} parent=63 // pred_fallthru
          _
        // Predicated region
        $region69: #{tpu_custom_call.1} parent=63 // pred_check
          %p515 = pneg %p194
        $region70: #{tpu_custom_call.1} parent=63 // pred_check_branch
          %517 = sbr.rel (%p515) target = $region72
        $region71: #{tpu_custom_call.1} parent=63 // pred_region
          %s518 = sand.u32 %s179, 1
          %s519 = scalar_lea.sflag [#allocation12], %s518
          %s520 = sand.u32 %s179, 1
          %s521 = smul.addr %s520, 16
          %s522 = scalar_lea.vmem [#allocation11], %s521
          %524 = dma.done %s519, 256
        $region72: #{tpu_custom_call.1} parent=63 // pred_fallthru
          _
      $region64: #{tpu_custom_call.1} parent=5 // pred_fallthru
        _
    $region6: #{tpu_custom_call.1} parent=1 // loop_footer
      %s29 = sadd.s32 1, %s25
    $region7: #{tpu_custom_call.1} parent=1 // loop_footer_branch
      %24 = sbr.rel target = $region3
    $region8: #{tpu_custom_call.1} parent=1 // loop_exit
      _
    %525 = vsyncpa [#allocation3], 1
    %s526 = scalar_lea.sflag [#allocation3], 1
    %527 = vsyncpa %s526, 1
    %528 = vsyncpa [#allocation6], 1
    %s529 = scalar_lea.sflag [#allocation6], 1
    %530 = vsyncpa %s529, 1
    %531 = vsyncpa [#allocation9], 1
    %532 = vsyncpa [#allocation4], 1
    %s533 = scalar_lea.sflag [#allocation4], 1
    %534 = vsyncpa %s533, 1
    %535 = vsyncpa [#allocation12], 1
    %s536 = scalar_lea.sflag [#allocation12], 1
    %537 = vsyncpa %s536, 1

</llo_original>
